<compile_context>
chip_gen: v7x
topology: tpu7x:2x2x1
jax: 0.10.0
libtpu: 0.0.40
codegen_flags: <defaults>
</compile_context>

<pallas_src>
import functools

import jax
import jax.numpy as jnp
from jax.experimental import pallas as pl
from jax.experimental.pallas import tpu as pltpu


def _round_up(n, m):
    return ((n + m - 1) // m) * m


def fused_linear_kernel(x_ref, w_ref, b_ref, o_ref):
    # (tb, D) @ (D, c_pad) on the MXU with f32 accumulation, bias add on the
    # VPU, then store only the real class lanes (narrow masked writeback).
    x = x_ref[...].astype(w_ref.dtype)
    acc = jnp.dot(x, w_ref[...], preferred_element_type=jnp.float32)
    acc = acc + b_ref[...]
    o_ref[...] = acc[:, : o_ref.shape[1]].astype(o_ref.dtype)


def prepare_params(w1, b1, w2, b2, *, use_bf16=True):
    """One-time fusion of the two Linear layers (hoisted out of the forward path).

    y = (x @ w1 + b1) @ w2 + b2  ==  x @ (w1 @ w2) + (b1 @ w2 + b2)
    since there is no nonlinearity between the layers. The fused weight/bias are
    zero-padded to a 128-lane multiple so the in-kernel matmul is MXU aligned;
    the kernel slices back to the real class count when storing.
    """
    w = (w1 @ w2).astype(jnp.float32)        # (D, C)
    b = (b1 @ w2 + b2).astype(jnp.float32)   # (1, C), kept f32 for the bias add
    num_classes = w.shape[1]
    c_pad = _round_up(max(num_classes, 128), 128)
    if c_pad != num_classes:
        w = jnp.pad(w, ((0, 0), (0, c_pad - num_classes)))
        b = jnp.pad(b, ((0, 0), (0, c_pad - num_classes)))
    if use_bf16:
        w = w.astype(jnp.bfloat16)           # native MXU dtype; halves resident W
    return w, b, num_classes


@functools.partial(jax.jit, static_argnames=("num_classes", "block_b"))
def top_model_forward(x, w_fused, b_fused, *, num_classes=11, block_b=4096):
    """y = x @ W_fused + b_fused via a single batch-tiled Pallas matmul."""
    B, D = x.shape
    c_pad = w_fused.shape[1]
    C = num_classes

    # Batch tile: multiple of 8 sublanes regardless of user block_b, capped at
    # block_b. If the whole batch fits in one tile (and is big enough), split
    # into 2 tiles so v7x's two TensorCores both get work under "parallel".
    tb = min(block_b, _round_up(B, 8))
    tb = max(8, (tb // 8) * 8)
    if tb >= B and B > 16:
        tb = max(8, _round_up((B + 1) // 2, 8))
    grid_b = pl.cdiv(B, tb)  # ragged last block: OOB rows never stored

    cost = pl.CostEstimate(
        flops=2 * B * D * c_pad,
        transcendentals=0,
        bytes_accessed=(
            x.size * x.dtype.itemsize
            + w_fused.size * w_fused.dtype.itemsize
            + b_fused.size * b_fused.dtype.itemsize
            + B * C * 4
        ),
    )

    return pl.pallas_call(
        fused_linear_kernel,
        out_shape=jax.ShapeDtypeStruct((B, C), jnp.float32),
        grid=(grid_b,),
        in_specs=[
            pl.BlockSpec((tb, D), lambda i: (i, 0)),       # x tile, streamed
            pl.BlockSpec((D, c_pad), lambda i: (0, 0)),    # fused W, VMEM-resident
            pl.BlockSpec((1, c_pad), lambda i: (0, 0)),    # fused b, VMEM-resident
        ],
        out_specs=pl.BlockSpec((tb, C), lambda i: (i, 0)),  # narrow 11-lane writeback
        compiler_params=pltpu.CompilerParams(
            dimension_semantics=("parallel",),              # megacore on v7x
        ),
        cost_estimate=cost,
    )(x, w_fused, b_fused)


def init_params(key, input_dim=128, hidden=64, num_classes=11):
    """Deterministic init mimicking nn.Linear's uniform(-1/sqrt(fan_in), ...)."""
    k1, k2, k3, k4 = jax.random.split(key, 4)
    bound1 = 1.0 / jnp.sqrt(input_dim)
    bound2 = 1.0 / jnp.sqrt(hidden)
    w1 = jax.random.uniform(k1, (input_dim, hidden), jnp.float32, -bound1, bound1)
    b1 = jax.random.uniform(k2, (1, hidden), jnp.float32, -bound1, bound1)
    w2 = jax.random.uniform(k3, (hidden, num_classes), jnp.float32, -bound2, bound2)
    b2 = jax.random.uniform(k4, (1, num_classes), jnp.float32, -bound2, bound2)
    return w1, b1, w2, b2


if __name__ == "__main__":
    input_dim, hidden, num_classes = 128, 64, 11

    key = jax.random.PRNGKey(0)
    kx, kp, kx2 = jax.random.split(key, 3)
    w1, b1, w2, b2 = init_params(kp, input_dim, hidden, num_classes)

    # --- Exact (f32 weights) path, small aligned batch.
    w_f32, b_f32, _ = prepare_params(w1, b1, w2, b2, use_bf16=False)
    batch = 8
    x = jax.random.normal(kx, (batch, input_dim), jnp.float32)
    out = top_model_forward(x, w_f32, b_f32, num_classes=num_classes)
    jax.block_until_ready(out)
    ref = (x @ w1 + b1) @ w2 + b2
    assert out.shape == (batch, num_classes)
    assert jnp.allclose(out, ref, atol=1e-4, rtol=1e-4)

    # --- bf16-weight path, non-tile-aligned batch (ragged last block, 2-step grid).
    w_bf16, b_bf16, _ = prepare_params(w1, b1, w2, b2, use_bf16=True)
    batch2 = 250
    x2 = jax.random.normal(kx2, (batch2, input_dim), jnp.float32)
    out2 = top_model_forward(x2, w_bf16, b_bf16, num_classes=num_classes)
    jax.block_until_ready(out2)
    ref2 = (x2 @ w1 + b1) @ w2 + b2
    assert out2.shape == (batch2, num_classes)
    assert jnp.allclose(out2, ref2, atol=2e-2, rtol=2e-2)  # bf16-weight tolerance

    print("KERNEL_OK")
</pallas_src>

<mosaic_0001>
module attributes {stable_mosaic.version = 11 : i64} {
  func.func @fused_linear_kernel(%arg0: i32, %arg1: memref<8x128xf32, #tpu.memory_space<vmem>>, %arg2: memref<128x128xf32, #tpu.memory_space<vmem>>, %arg3: memref<1x128xf32, #tpu.memory_space<vmem>>, %arg4: memref<8x11xf32, #tpu.memory_space<vmem>>) attributes {dimension_semantics = [#tpu.dimension_semantics<parallel>], iteration_bounds = array<i64: 1>, scalar_prefetch = 0 : i64, scratch_operands = 0 : i64, tpu.core_type = #tpu.core_type<tc>, window_params = [{transform_indices = @transform_0, window_bounds = array<i64: 8, 128>}, {pipeline_mode = #tpu.pipeline_mode<synchronous>, transform_indices = @transform_1, window_bounds = array<i64: 128, 128>}, {pipeline_mode = #tpu.pipeline_mode<synchronous>, transform_indices = @transform_2, window_bounds = array<i64: 1, 128>}, {transform_indices = @transform_3, window_bounds = array<i64: 8, 11>}]} {
    %c0 = arith.constant 0 : index
    %c0_0 = arith.constant 0 : index
    %0 = vector.load %arg1[%c0, %c0_0] : memref<8x128xf32, #tpu.memory_space<vmem>>, vector<8x128xf32>
    %c0_1 = arith.constant 0 : index
    %c0_2 = arith.constant 0 : index
    %1 = vector.load %arg2[%c0_1, %c0_2] : memref<128x128xf32, #tpu.memory_space<vmem>>, vector<128x128xf32>
    %cst = arith.constant dense<0.000000e+00> : vector<8x128xf32>
    %2 = tpu.matmul %0, %1, %cst {dimension_numbers = #tpu.dot_dimension_numbers<[1], [0], [0], [1], [0, 0, 1, 1], [], []>} : vector<8x128xf32>, vector<128x128xf32>, vector<8x128xf32> -> vector<8x128xf32>
    %c0_3 = arith.constant 0 : index
    %c0_4 = arith.constant 0 : index
    %3 = vector.load %arg3[%c0_3, %c0_4] : memref<1x128xf32, #tpu.memory_space<vmem>>, vector<1x128xf32>
    %4 = vector.broadcast %3 : vector<1x128xf32> to vector<8x128xf32>
    %5 = arith.addf %2, %4 : vector<8x128xf32>
    %6 = vector.extract_strided_slice %5 {offsets = [0, 0], sizes = [8, 11], strides = [1, 1]} : vector<8x128xf32> to vector<8x11xf32>
    %c0_5 = arith.constant 0 : index
    %c0_6 = arith.constant 0 : index
    %7 = vector.load %arg4[%c0_5, %c0_6] : memref<8x11xf32, #tpu.memory_space<vmem>>, vector<8x11xf32>
    tpu.vector_store %arg4[%c0_5, %c0_6], %6 {strides = array<i32>} : memref<8x11xf32, #tpu.memory_space<vmem>>, vector<8x11xf32>,
    return
  }
  func.func @transform_0(%arg0: i32) -> (i32, i32) {
    %c0_i32 = arith.constant 0 : i32
    %c0_i32_0 = arith.constant 0 : i32
    return %arg0, %c0_i32 : i32, i32
  }
  func.func @transform_1(%arg0: i32) -> (i32, i32) {
    %c0_i32 = arith.constant 0 : i32
    %c0_i32_0 = arith.constant 0 : i32
    %c0_i32_1 = arith.constant 0 : i32
    return %c0_i32, %c0_i32_0 : i32, i32
  }
  func.func @transform_2(%arg0: i32) -> (i32, i32) {
    %c0_i32 = arith.constant 0 : i32
    %c0_i32_0 = arith.constant 0 : i32
    %c0_i32_1 = arith.constant 0 : i32
    return %c0_i32, %c0_i32_0 : i32, i32
  }
  func.func @transform_3(%arg0: i32) -> (i32, i32) {
    %c0_i32 = arith.constant 0 : i32
    %c0_i32_0 = arith.constant 0 : i32
    return %arg0, %c0_i32 : i32, i32
  }
}

</mosaic_0001>

<llo_original>
// kernel: top_model_forward.1
$region0: #{top_model_forward.1}
  #allocation0 [shape = 'u32[]', space=smem, size = 0x4, offset = 0x4, fixed_abs, tag = 'smem constant byte address 0x4 - core index']
  #allocation1 [shape = 'u32[144,128]{1,0:T(1,128)}', space=vmem, size = 0x12000, scoped, tag = 'internal scratch']
  %s0 = inlined_call_operand.hbm [shape: f32[8,128], index: 0, kind: input, shape index: {}]
  %s1 = inlined_call_operand.hbm [shape: f32[128,128], index: 1, kind: input, shape index: {}]
  %s2 = inlined_call_operand.vmem [shape: f32[1,128], index: 2, kind: input, shape index: {}]
  %s3 = inlined_call_operand.hbm [shape: f32[8,11], index: 3, kind: output, shape index: {}]
  %s4 = sld [smem:[#allocation0]]
  $region30: #{top_model_forward.1} parent=0
    _
  %s6 = ssub.s32 1, %s4
  %s7 = scalar_select 0, %s6, %s4
  $region1: #{top_model_forward.1} parent=0
    #allocation2 [shape = 'u8[4096]{0}', space=vmem, size = 0x1000, scoped, tag = 'input window, operand 0, single buffered']
    #allocation3 [shape = 's32[1]{0}', space=sflag, size = 0x4, scoped, tag = 'scoped memory for top_model_forward.1']
    #allocation4 [shape = 's32[1]{0}', space=sflag, size = 0x4, scoped, tag = 'scoped memory for top_model_forward.1']
    #allocation5 [shape = 'u8[65536]{0}', space=vmem, size = 0x10000, scoped, tag = 'input window, operand 1, single buffered']
    #allocation6 [shape = 's32[1]{0}', space=sflag, size = 0x4, scoped, tag = 'scoped memory for top_model_forward.1']
    #allocation7 [shape = 'u8[4096]{0}', space=vmem, size = 0x1000, scoped, tag = 'output window, operand 0, single buffered']
    %8 = vsyncpa [#allocation3], 0
    %9 = vsyncpa [#allocation6], 0
    %10 = vsyncpa [#allocation4], 0
    // Predicated region
    $region2: #{top_model_forward.1} parent=1 // pred_check
      _
    $region3: #{top_model_forward.1} parent=1 // pred_check_branch
      %12 = sbr.rel (0) target = $region5
    $region4: #{top_model_forward.1} parent=1 // pred_region
      %s14 = ssub.s32 128, 128
      %15 = vsyncadd [#allocation3], %s14
      %s17 = sshll.u32 [#allocation2], 4
      %s18 = int_to_ptr.vmem [resolvable:$true] %s17
      %20 = dma.hbm_to_vmem [thread:$0]  %s0, 128, %s18, [#allocation3]
    $region5: #{top_model_forward.1} parent=1 // pred_fallthru
      _
    // Predicated region
    $region6: #{top_model_forward.1} parent=1 // pred_check
      _
    $region7: #{top_model_forward.1} parent=1 // pred_check_branch
      %22 = sbr.rel (0) target = $region9
    $region8: #{top_model_forward.1} parent=1 // pred_region
      %s24 = ssub.s32 2048, 2048
      %25 = vsyncadd [#allocation6], %s24
      %s26 = sshll.u32 [#allocation5], 4
      %s27 = int_to_ptr.vmem [resolvable:$true] %s26
      %32 = dma.hbm_to_vmem [thread:$0]  %s1, 2048, %s27, [#allocation6], 128, 128, 8
    $region9: #{top_model_forward.1} parent=1 // pred_fallthru
      _
    // Predicated region
    $region10: #{top_model_forward.1} parent=1 // pred_check
      _
    $region11: #{top_model_forward.1} parent=1 // pred_check_branch
      %34 = sbr.rel (0) target = $region13
    $region12: #{top_model_forward.1} parent=1 // pred_region
      _
    $region13: #{top_model_forward.1} parent=1 // pred_fallthru
      _
    // Predicated region
    $region14: #{top_model_forward.1} parent=1 // pred_check
      _
    $region15: #{top_model_forward.1} parent=1 // pred_check_branch
      %36 = sbr.rel (0) target = $region17
    $region16: #{top_model_forward.1} parent=1 // pred_region
      %37 = dma.done [#allocation3], 128
    $region17: #{top_model_forward.1} parent=1 // pred_fallthru
      _
    // Predicated region
    $region18: #{top_model_forward.1} parent=1 // pred_check
      _
    $region19: #{top_model_forward.1} parent=1 // pred_check_branch
      %39 = sbr.rel (0) target = $region21
    $region20: #{top_model_forward.1} parent=1 // pred_region
      %40 = dma.done [#allocation6], 2048
    $region21: #{top_model_forward.1} parent=1 // pred_fallthru
      _
    %v41 = vld [vmem:[#allocation2] sm:$0xff]
    %v42 = vld [vmem:[#allocation5] sm:$0xff]
    %v43 = vld [vmem:[#allocation5 + $0x8] sm:$0xff]
    %v44 = vld [vmem:[#allocation5 + $0x10] sm:$0xff]
    %v45 = vld [vmem:[#allocation5 + $0x18] sm:$0xff]
    %v46 = vld [vmem:[#allocation5 + $0x20] sm:$0xff]
    %v47 = vld [vmem:[#allocation5 + $0x28] sm:$0xff]
    %v48 = vld [vmem:[#allocation5 + $0x30] sm:$0xff]
    %v49 = vld [vmem:[#allocation5 + $0x38] sm:$0xff]
    %v50 = vld [vmem:[#allocation5 + $0x40] sm:$0xff]
    %v51 = vld [vmem:[#allocation5 + $0x48] sm:$0xff]
    %v52 = vld [vmem:[#allocation5 + $0x50] sm:$0xff]
    %v53 = vld [vmem:[#allocation5 + $0x58] sm:$0xff]
    %v54 = vld [vmem:[#allocation5 + $0x60] sm:$0xff]
    %v55 = vld [vmem:[#allocation5 + $0x68] sm:$0xff]
    %v56 = vld [vmem:[#allocation5 + $0x70] sm:$0xff]
    %v57 = vld [vmem:[#allocation5 + $0x78] sm:$0xff]
    %v58 = vld [vmem:[%s2] sm:$0x1]
    %v60 = vlaneseq
    %v61 = vshrl.u32 %v60, 7
    %v62 = vsub.s32 0, %v61
    %v63 = vrot.slane %v58, %v62
    %65 = vmatprep.subr.mxu0 0.0
    %66 = vmatpush1.msra.mxu0 %v42
    %67 = vmatprep.subr.mxu0 0.0
    %68 = vmatpush1.msra.mxu0 %v43
    %69 = vmatprep.subr.mxu0 0.0
    %70 = vmatpush1.msra.mxu0 %v44
    %71 = vmatprep.subr.mxu0 0.0
    %72 = vmatpush1.msra.mxu0 %v45
    %73 = vmatprep.subr.mxu0 0.0
    %74 = vmatpush1.msra.mxu0 %v46
    %75 = vmatprep.subr.mxu0 0.0
    %76 = vmatpush1.msra.mxu0 %v47
    %77 = vmatprep.subr.mxu0 0.0
    %78 = vmatpush1.msra.mxu0 %v48
    %79 = vmatprep.subr.mxu0 0.0
    %80 = vmatpush1.msra.mxu0 %v49
    %81 = vmatprep.subr.mxu0 0.0
    %82 = vmatpush1.msra.mxu0 %v50
    %83 = vmatprep.subr.mxu0 0.0
    %84 = vmatpush1.msra.mxu0 %v51
    %85 = vmatprep.subr.mxu0 0.0
    %86 = vmatpush1.msra.mxu0 %v52
    %87 = vmatprep.subr.mxu0 0.0
    %88 = vmatpush1.msra.mxu0 %v53
    %89 = vmatprep.subr.mxu0 0.0
    %90 = vmatpush1.msra.mxu0 %v54
    %91 = vmatprep.subr.mxu0 0.0
    %92 = vmatpush1.msra.mxu0 %v55
    %93 = vmatprep.subr.mxu0 0.0
    %94 = vmatpush1.msra.mxu0 %v56
    %95 = vmatprep.subr.mxu0 0.0
    %96 = vmatpush1.msra.mxu0 %v57
    %97 = vmatprep.subr.mxu0 0.0
    %98 = vmatpush1.msra.mxu0 0.0
    %99 = vmatprep.subr.mxu0 0.0
    %100 = vmatpush1.msra.mxu0 0.0
    %101 = vmatprep.subr.mxu0 0.0
    %102 = vmatpush1.msra.mxu0 0.0
    %103 = vmatprep.subr.mxu0 0.0
    %104 = vmatpush1.msra.mxu0 0.0
    %105 = vmatprep.subr.mxu0 0.0
    %106 = vmatpush1.msra.mxu0 0.0
    %107 = vmatprep.subr.mxu0 0.0
    %108 = vmatpush1.msra.mxu0 0.0
    %109 = vmatprep.subr.mxu0 0.0
    %110 = vmatpush1.msra.mxu0 0.0
    %111 = vmatprep.subr.mxu0 0.0
    %112 = vmatpush1.msra.mxu0 0.0
    %113 = vmatprep.subr.mxu0 0.0
    %114 = vmatpush1.msra.mxu0 0.0
    %115 = vmatprep.subr.mxu0 0.0
    %116 = vmatpush1.msra.mxu0 0.0
    %117 = vmatprep.subr.mxu0 0.0
    %118 = vmatpush1.msra.mxu0 0.0
    %119 = vmatprep.subr.mxu0 0.0
    %120 = vmatpush1.msra.mxu0 0.0
    %121 = vmatprep.subr.mxu0 0.0
    %122 = vmatpush1.msra.mxu0 0.0
    %123 = vmatprep.subr.mxu0 0.0
    %124 = vmatpush1.msra.mxu0 0.0
    %125 = vmatprep.subr.mxu0 0.0
    %126 = vmatpush1.msra.mxu0 0.0
    %127 = vmatprep.subr.mxu0 0.0
    %128 = vmatpush1.msra.mxu0 0.0
    %129 = vmatprep.mubr.f32.mxu0 0.0
    %130 = vmatmul.mubr.f32.gmra.mrb[0].mxu0 %v41
    %v131 = vpop.f32.mrb[0].mxu0
    %v132 = vadd.f32 %v63, %v131
    %v133 = vpop.f32.mrb[0].mxu0
    %134 = vdwg.mxu0
    %vm135 = vcmask 89088
    %136 = vst.msk [vmem:[#allocation7] sm:$0xff] %vm135, %v132
    // Predicated region
    $region22: #{top_model_forward.1} parent=1 // pred_check
      _
    $region23: #{top_model_forward.1} parent=1 // pred_check_branch
      %138 = sbr.rel (0) target = $region25
    $region24: #{top_model_forward.1} parent=1 // pred_region
      %s140 = ssub.s32 128, 128
      %141 = vsyncadd [#allocation4], %s140
      %s143 = sshll.u32 [#allocation7], 4
      %s144 = int_to_ptr.vmem [resolvable:$true] %s143
      %146 = dma.vmem_to_hbm [thread:$0]  %s144, 128, %s3, [#allocation4]
    $region25: #{top_model_forward.1} parent=1 // pred_fallthru
      _
    // Predicated region
    $region26: #{top_model_forward.1} parent=1 // pred_check
      _
    $region27: #{top_model_forward.1} parent=1 // pred_check_branch
      %148 = sbr.rel (0) target = $region29
    $region28: #{top_model_forward.1} parent=1 // pred_region
      %149 = dma.done [#allocation4], 128
    $region29: #{top_model_forward.1} parent=1 // pred_fallthru
      _
    %150 = vsyncpa [#allocation3], 1
    %151 = vsyncpa [#allocation6], 1
    %152 = vsyncpa [#allocation4], 1

</llo_original>
